<compile_context>
chip_gen: v6e
topology: v6e:2x2x1
jax: 0.10.0
libtpu: 0.0.40
codegen_flags: <defaults>
</compile_context>

<pallas_src>
import functools

import jax
import jax.numpy as jnp
from jax import lax
from jax.experimental import pallas as pl
from jax.experimental.pallas import tpu as pltpu


def _attention_kernel(x_ref, wq_ref, wk_ref, wv_ref, bq_ref, bk_ref, bv_ref,
                      pol_ref, wp_ref, bp_ref, o_ref, acc_ref,
                      *, scale, eps, use_policy):
    h = pl.program_id(1)
    num_heads = pl.num_programs(1)

    @pl.when(h == 0)
    def _():
        acc_ref[...] = jnp.zeros_like(acc_ref)

    x = x_ref[0]                                                     # (N, C)

    # Per-head Q/K/V projection (union over heads == full qkv Linear).
    q = jnp.dot(x, wq_ref[0], preferred_element_type=jnp.float32) + bq_ref[0]
    k = jnp.dot(x, wk_ref[0], preferred_element_type=jnp.float32) + bk_ref[0]
    v = jnp.dot(x, wv_ref[0], preferred_element_type=jnp.float32) + bv_ref[0]

    # scores = (q @ k^T) * scale  — contract head_dim, no explicit transpose.
    s = jnp.einsum('nd,md->nm', q, k,
                   preferred_element_type=jnp.float32) * scale       # (N, N)

    m = jnp.max(s, axis=-1, keepdims=True)
    p = jnp.exp(s - m)

    if use_policy:
        n = s.shape[-1]
        pol = pol_ref[0].astype(jnp.float32)                         # (1, N)
        row = lax.broadcasted_iota(jnp.int32, (n, n), 0)
        col = lax.broadcasted_iota(jnp.int32, (n, n), 1)
        eye = (row == col).astype(jnp.float32)
        attn_policy = pol + (1.0 - pol) * eye                        # (N, N)
        p = p * attn_policy
        attn = (p + eps / n) / (jnp.sum(p, axis=-1, keepdims=True) + eps)
    else:
        attn = p / jnp.sum(p, axis=-1, keepdims=True)

    ctx = jnp.dot(attn, v, preferred_element_type=jnp.float32)       # (N, Dh)

    # Per-head slice of the output projection; accumulate over heads in f32.
    acc_ref[...] += jnp.dot(ctx, wp_ref[0], preferred_element_type=jnp.float32)

    @pl.when(h == num_heads - 1)
    def _():
        o_ref[0] = (acc_ref[...] + bp_ref[...]).astype(o_ref.dtype)


def attention_forward(x, qkv_weight, qkv_bias, proj_weight, proj_bias,
                      num_heads, policy=None, qk_scale=None, eps=1e-6):
    """Pallas forward of the PyTorch `Attention` module.

    x:           [B, N, C]
    qkv_weight:  [3C, C]   (PyTorch nn.Linear weight layout)
    qkv_bias:    [3C] or None
    proj_weight: [C, C]
    proj_bias:   [C]
    policy:      [B, N, 1] keep-mask or None
    """
    B, N, C = x.shape
    H = num_heads
    Dh = C // H
    scale = qk_scale if qk_scale is not None else Dh ** (-0.5)

    # --- one-time weight rearrangement (cache at init in real use) ---
    # qkv output order is [3, H, Dh] along the 3C axis (matches reshape in torch).
    wq = qkv_weight[0 * C:1 * C].reshape(H, Dh, C).transpose(0, 2, 1)   # [H, C, Dh]
    wk = qkv_weight[1 * C:2 * C].reshape(H, Dh, C).transpose(0, 2, 1)
    wv = qkv_weight[2 * C:3 * C].reshape(H, Dh, C).transpose(0, 2, 1)
    if qkv_bias is None:
        bq = bk = bv = jnp.zeros((H, 1, Dh), dtype=x.dtype)
    else:
        bq = qkv_bias[0 * C:1 * C].reshape(H, 1, Dh)
        bk = qkv_bias[1 * C:2 * C].reshape(H, 1, Dh)
        bv = qkv_bias[2 * C:3 * C].reshape(H, 1, Dh)
    wp = proj_weight.T.reshape(H, Dh, C)                                # [H, Dh, C]
    bp = proj_bias.reshape(1, C)

    use_policy = policy is not None
    if use_policy:
        pol = policy.reshape(B, 1, N).astype(x.dtype)
    else:
        pol = jnp.ones((B, 1, N), dtype=x.dtype)

    kernel = functools.partial(_attention_kernel, scale=float(scale),
                               eps=float(eps), use_policy=use_policy)

    out = pl.pallas_call(
        kernel,
        out_shape=jax.ShapeDtypeStruct((B, N, C), x.dtype),
        grid_spec=pltpu.PrefetchScalarGridSpec(
            num_scalar_prefetch=0,
            grid=(B, H),
            in_specs=[
                pl.BlockSpec((1, N, C), lambda b, h: (b, 0, 0)),     # x
                pl.BlockSpec((1, C, Dh), lambda b, h: (h, 0, 0)),    # wq
                pl.BlockSpec((1, C, Dh), lambda b, h: (h, 0, 0)),    # wk
                pl.BlockSpec((1, C, Dh), lambda b, h: (h, 0, 0)),    # wv
                pl.BlockSpec((1, 1, Dh), lambda b, h: (h, 0, 0)),    # bq
                pl.BlockSpec((1, 1, Dh), lambda b, h: (h, 0, 0)),    # bk
                pl.BlockSpec((1, 1, Dh), lambda b, h: (h, 0, 0)),    # bv
                pl.BlockSpec((1, 1, N), lambda b, h: (b, 0, 0)),     # policy
                pl.BlockSpec((1, Dh, C), lambda b, h: (h, 0, 0)),    # wp
                pl.BlockSpec((1, C), lambda b, h: (0, 0)),           # bp
            ],
            out_specs=pl.BlockSpec((1, N, C), lambda b, h: (b, 0, 0)),
            scratch_shapes=[pltpu.VMEM((N, C), jnp.float32)],
        ),
        compiler_params=pltpu.CompilerParams(
            dimension_semantics=("parallel", "arbitrary")),
    )(x, wq, wk, wv, bq, bk, bv, pol, wp, bp)
    return out


if __name__ == "__main__":
    # Small config consistent with the module: batch=2, seq=8, dim=32, 4 heads.
    B, N, C, H = 2, 8, 32, 4

    key = jax.random.PRNGKey(0)
    kx, kqw, kqb, kpw, kpb, kp = jax.random.split(key, 6)
    x = jax.random.normal(kx, (B, N, C), dtype=jnp.float32)
    qkv_w = jax.random.normal(kqw, (3 * C, C), dtype=jnp.float32) * 0.05
    qkv_b = jax.random.normal(kqb, (3 * C,), dtype=jnp.float32) * 0.05
    proj_w = jax.random.normal(kpw, (C, C), dtype=jnp.float32) * 0.05
    proj_b = jax.random.normal(kpb, (C,), dtype=jnp.float32) * 0.05
    policy = (jax.random.uniform(kp, (B, N, 1)) > 0.3).astype(jnp.float32)

    # --- pure-JAX reference replicating the PyTorch module exactly ---
    def reference(x, policy):
        scale = (C // H) ** (-0.5)
        qkv = x @ qkv_w.T + qkv_b
        qkv = qkv.reshape(B, N, 3, H, C // H).transpose(2, 0, 3, 1, 4)
        q, k, v = qkv[0], qkv[1], qkv[2]
        attn = jnp.einsum('bhnd,bhmd->bhnm', q, k) * scale
        if policy is None:
            attn = jax.nn.softmax(attn, axis=-1)
        else:
            eps = 1e-6
            ap = policy.reshape(B, 1, 1, N)
            eye = jnp.eye(N, dtype=ap.dtype).reshape(1, 1, N, N)
            ap = ap + (1.0 - ap) * eye
            m = attn.max(-1, keepdims=True)
            p = jnp.exp(attn - m) * ap
            attn = (p + eps / N) / (p.sum(-1, keepdims=True) + eps)
        out = jnp.einsum('bhnm,bhmd->bhnd', attn, v)
        out = out.transpose(0, 2, 1, 3).reshape(B, N, C)
        return out @ proj_w.T + proj_b

    # Policy-masked softmax path.
    out_pol = attention_forward(x, qkv_w, qkv_b, proj_w, proj_b, H, policy=policy)
    out_pol = jax.block_until_ready(out_pol)
    ref_pol = reference(x, policy)
    assert out_pol.shape == (B, N, C)
    assert jnp.allclose(out_pol, ref_pol, atol=1e-4, rtol=1e-4), \
        float(jnp.max(jnp.abs(out_pol - ref_pol)))

    # Plain-softmax path (policy=None).
    out_plain = attention_forward(x, qkv_w, qkv_b, proj_w, proj_b, H, policy=None)
    out_plain = jax.block_until_ready(out_plain)
    ref_plain = reference(x, None)
    assert jnp.allclose(out_plain, ref_plain, atol=1e-4, rtol=1e-4), \
        float(jnp.max(jnp.abs(out_plain - ref_plain)))

    print("KERNEL_OK")
</pallas_src>

<mosaic_0001>
module attributes {stable_mosaic.version = 11 : i64} {
  func.func @_attention_kernel(%arg0: i32, %arg1: i32, %arg2: memref<1x8x32xf32, #tpu.memory_space<vmem>>, %arg3: memref<1x32x8xf32, #tpu.memory_space<vmem>>, %arg4: memref<1x32x8xf32, #tpu.memory_space<vmem>>, %arg5: memref<1x32x8xf32, #tpu.memory_space<vmem>>, %arg6: memref<1x1x8xf32, #tpu.memory_space<vmem>>, %arg7: memref<1x1x8xf32, #tpu.memory_space<vmem>>, %arg8: memref<1x1x8xf32, #tpu.memory_space<vmem>>, %arg9: memref<1x1x8xf32, #tpu.memory_space<vmem>>, %arg10: memref<1x8x32xf32, #tpu.memory_space<vmem>>, %arg11: memref<1x32xf32, #tpu.memory_space<vmem>>, %arg12: memref<1x8x32xf32, #tpu.memory_space<vmem>>, %arg13: memref<8x32xf32, #tpu.memory_space<vmem>>) attributes {dimension_semantics = [#tpu.dimension_semantics<parallel>, #tpu.dimension_semantics<arbitrary>], iteration_bounds = array<i64: 2, 4>, scalar_prefetch = 0 : i64, scratch_operands = 1 : i64, tpu.core_type = #tpu.core_type<tc>, window_params = [{transform_indices = @transform_0, window_bounds = array<i64: 1, 8, 32>}, {transform_indices = @transform_1, window_bounds = array<i64: 1, 32, 8>}, {transform_indices = @transform_2, window_bounds = array<i64: 1, 32, 8>}, {transform_indices = @transform_3, window_bounds = array<i64: 1, 32, 8>}, {transform_indices = @transform_4, window_bounds = array<i64: 1, 1, 8>}, {transform_indices = @transform_5, window_bounds = array<i64: 1, 1, 8>}, {transform_indices = @transform_6, window_bounds = array<i64: 1, 1, 8>}, {transform_indices = @transform_7, window_bounds = array<i64: 1, 1, 8>}, {transform_indices = @transform_8, window_bounds = array<i64: 1, 8, 32>}, {pipeline_mode = #tpu.pipeline_mode<synchronous>, transform_indices = @transform_9, window_bounds = array<i64: 1, 32>}, {transform_indices = @transform_10, window_bounds = array<i64: 1, 8, 32>}]} {
    %c0_i32 = arith.constant 0 : i32
    %0 = arith.cmpi eq, %arg1, %c0_i32 : i32
    %1 = arith.extui %0 : i1 to i32
    %c0_i32_0 = arith.constant 0 : i32
    %2 = arith.cmpi ne, %1, %c0_i32_0 : i32
    scf.if %2 {
      %cst_43 = arith.constant 0.000000e+00 : f32
      %66 = vector.broadcast %cst_43 : f32 to vector<8x32xf32>
      %c0_44 = arith.constant 0 : index
      %c0_45 = arith.constant 0 : index
      %67 = vector.load %arg13[%c0_44, %c0_45] : memref<8x32xf32, #tpu.memory_space<vmem>>, vector<8x32xf32>
      tpu.vector_store %arg13[%c0_44, %c0_45], %66 {strides = array<i32>} : memref<8x32xf32, #tpu.memory_space<vmem>>, vector<8x32xf32>,
    } else {
    }
    %c0 = arith.constant 0 : index
    %c0_1 = arith.constant 0 : index
    %c0_2 = arith.constant 0 : index
    %3 = vector.load %arg2[%c0, %c0_1, %c0_2] : memref<1x8x32xf32, #tpu.memory_space<vmem>>, vector<1x8x32xf32>
    %4 = vector.shape_cast %3 : vector<1x8x32xf32> to vector<8x32xf32>
    %c0_3 = arith.constant 0 : index
    %c0_4 = arith.constant 0 : index
    %c0_5 = arith.constant 0 : index
    %5 = vector.load %arg3[%c0_3, %c0_4, %c0_5] : memref<1x32x8xf32, #tpu.memory_space<vmem>>, vector<1x32x8xf32>
    %6 = vector.shape_cast %5 : vector<1x32x8xf32> to vector<32x8xf32>
    %cst = arith.constant dense<0.000000e+00> : vector<8x8xf32>
    %7 = tpu.matmul %4, %6, %cst {dimension_numbers = #tpu.dot_dimension_numbers<[1], [0], [0], [1], [0, 0, 1, 1], [], []>} : vector<8x32xf32>, vector<32x8xf32>, vector<8x8xf32> -> vector<8x8xf32>
    %c0_6 = arith.constant 0 : index
    %c0_7 = arith.constant 0 : index
    %c0_8 = arith.constant 0 : index
    %8 = vector.load %arg6[%c0_6, %c0_7, %c0_8] : memref<1x1x8xf32, #tpu.memory_space<vmem>>, vector<1x1x8xf32>
    %9 = vector.shape_cast %8 : vector<1x1x8xf32> to vector<1x8xf32>
    %10 = vector.broadcast %9 : vector<1x8xf32> to vector<8x8xf32>
    %11 = arith.addf %7, %10 : vector<8x8xf32>
    %c0_9 = arith.constant 0 : index
    %c0_10 = arith.constant 0 : index
    %c0_11 = arith.constant 0 : index
    %12 = vector.load %arg4[%c0_9, %c0_10, %c0_11] : memref<1x32x8xf32, #tpu.memory_space<vmem>>, vector<1x32x8xf32>
    %13 = vector.shape_cast %12 : vector<1x32x8xf32> to vector<32x8xf32>
    %cst_12 = arith.constant dense<0.000000e+00> : vector<8x8xf32>
    %14 = tpu.matmul %4, %13, %cst_12 {dimension_numbers = #tpu.dot_dimension_numbers<[1], [0], [0], [1], [0, 0, 1, 1], [], []>} : vector<8x32xf32>, vector<32x8xf32>, vector<8x8xf32> -> vector<8x8xf32>
    %c0_13 = arith.constant 0 : index
    %c0_14 = arith.constant 0 : index
    %c0_15 = arith.constant 0 : index
    %15 = vector.load %arg7[%c0_13, %c0_14, %c0_15] : memref<1x1x8xf32, #tpu.memory_space<vmem>>, vector<1x1x8xf32>
    %16 = vector.shape_cast %15 : vector<1x1x8xf32> to vector<1x8xf32>
    %17 = vector.broadcast %16 : vector<1x8xf32> to vector<8x8xf32>
    %18 = arith.addf %14, %17 : vector<8x8xf32>
    %c0_16 = arith.constant 0 : index
    %c0_17 = arith.constant 0 : index
    %c0_18 = arith.constant 0 : index
    %19 = vector.load %arg5[%c0_16, %c0_17, %c0_18] : memref<1x32x8xf32, #tpu.memory_space<vmem>>, vector<1x32x8xf32>
    %20 = vector.shape_cast %19 : vector<1x32x8xf32> to vector<32x8xf32>
    %cst_19 = arith.constant dense<0.000000e+00> : vector<8x8xf32>
    %21 = tpu.matmul %4, %20, %cst_19 {dimension_numbers = #tpu.dot_dimension_numbers<[1], [0], [0], [1], [0, 0, 1, 1], [], []>} : vector<8x32xf32>, vector<32x8xf32>, vector<8x8xf32> -> vector<8x8xf32>
    %c0_20 = arith.constant 0 : index
    %c0_21 = arith.constant 0 : index
    %c0_22 = arith.constant 0 : index
    %22 = vector.load %arg8[%c0_20, %c0_21, %c0_22] : memref<1x1x8xf32, #tpu.memory_space<vmem>>, vector<1x1x8xf32>
    %23 = vector.shape_cast %22 : vector<1x1x8xf32> to vector<1x8xf32>
    %24 = vector.broadcast %23 : vector<1x8xf32> to vector<8x8xf32>
    %25 = arith.addf %21, %24 : vector<8x8xf32>
    "tpu.trace_start"() <{level = 10 : i32, message = "nd,md->nm"}> : () -> ()
    %cst_23 = arith.constant dense<0.000000e+00> : vector<8x8xf32>
    %26 = tpu.matmul %11, %18, %cst_23 {dimension_numbers = #tpu.dot_dimension_numbers<[1], [1], [0], [0], [0, 0, 1, 0], [], []>} : vector<8x8xf32>, vector<8x8xf32>, vector<8x8xf32> -> vector<8x8xf32>
    "tpu.trace_stop"() : () -> ()
    %cst_24 = arith.constant 0.353553385 : f32
    %27 = vector.broadcast %cst_24 : f32 to vector<8x8xf32>
    %28 = arith.mulf %26, %27 : vector<8x8xf32>
    %cst_25 = arith.constant dense<0xFF800000> : vector<8xf32>
    %29 = vector.multi_reduction <maximumf>, %28, %cst_25 [1] : vector<8x8xf32> to vector<8xf32>
    %30 = vector.shape_cast %29 : vector<8xf32> to vector<8x1xf32>
    %31 = vector.broadcast %30 : vector<8x1xf32> to vector<8x8xf32>
    %32 = arith.subf %28, %31 : vector<8x8xf32>
    %33 = math.exp %32 : vector<8x8xf32>
    %c0_26 = arith.constant 0 : index
    %c0_27 = arith.constant 0 : index
    %c0_28 = arith.constant 0 : index
    %34 = vector.load %arg9[%c0_26, %c0_27, %c0_28] : memref<1x1x8xf32, #tpu.memory_space<vmem>>, vector<1x1x8xf32>
    %35 = vector.shape_cast %34 : vector<1x1x8xf32> to vector<1x8xf32>
    %36 = tpu.iota {dimensions = array<i32: 0>} : vector<8x8xi32>
    %37 = tpu.iota {dimensions = array<i32: 1>} : vector<8x8xi32>
    %38 = arith.cmpi eq, %36, %37 : vector<8x8xi32>
    %39 = arith.extui %38 : vector<8x8xi1> to vector<8x8xi32>
    %40 = arith.sitofp %39 : vector<8x8xi32> to vector<8x8xf32>
    %cst_29 = arith.constant 1.000000e+00 : f32
    %41 = vector.broadcast %cst_29 : f32 to vector<1x8xf32>
    %42 = arith.subf %41, %35 : vector<1x8xf32>
    %43 = vector.broadcast %42 : vector<1x8xf32> to vector<8x8xf32>
    %44 = arith.mulf %43, %40 : vector<8x8xf32>
    %45 = vector.broadcast %35 : vector<1x8xf32> to vector<8x8xf32>
    %46 = arith.addf %45, %44 : vector<8x8xf32>
    %47 = arith.mulf %33, %46 : vector<8x8xf32>
    %cst_30 = arith.constant 1.250000e-07 : f32
    %48 = vector.broadcast %cst_30 : f32 to vector<8x8xf32>
    %49 = arith.addf %47, %48 : vector<8x8xf32>
    %cst_31 = arith.constant dense<0.000000e+00> : vector<8xf32>
    %50 = vector.multi_reduction <add>, %47, %cst_31 [1] : vector<8x8xf32> to vector<8xf32>
    %51 = vector.shape_cast %50 : vector<8xf32> to vector<8x1xf32>
    %cst_32 = arith.constant 9.99999997E-7 : f32
    %52 = vector.broadcast %cst_32 : f32 to vector<8x1xf32>
    %53 = arith.addf %51, %52 : vector<8x1xf32>
    %54 = vector.broadcast %53 : vector<8x1xf32> to vector<8x8xf32>
    %55 = arith.divf %49, %54 : vector<8x8xf32>
    %cst_33 = arith.constant dense<0.000000e+00> : vector<8x8xf32>
    %56 = tpu.matmul %55, %25, %cst_33 {dimension_numbers = #tpu.dot_dimension_numbers<[1], [0], [0], [1], [0, 0, 1, 1], [], []>} : vector<8x8xf32>, vector<8x8xf32>, vector<8x8xf32> -> vector<8x8xf32>
    %c0_34 = arith.constant 0 : index
    %c0_35 = arith.constant 0 : index
    %57 = vector.load %arg13[%c0_34, %c0_35] : memref<8x32xf32, #tpu.memory_space<vmem>>, vector<8x32xf32>
    %c0_36 = arith.constant 0 : index
    %c0_37 = arith.constant 0 : index
    %c0_38 = arith.constant 0 : index
    %58 = vector.load %arg10[%c0_36, %c0_37, %c0_38] : memref<1x8x32xf32, #tpu.memory_space<vmem>>, vector<1x8x32xf32>
    %59 = vector.shape_cast %58 : vector<1x8x32xf32> to vector<8x32xf32>
    %cst_39 = arith.constant dense<0.000000e+00> : vector<8x32xf32>
    %60 = tpu.matmul %56, %59, %cst_39 {dimension_numbers = #tpu.dot_dimension_numbers<[1], [0], [0], [1], [0, 0, 1, 1], [], []>} : vector<8x8xf32>, vector<8x32xf32>, vector<8x32xf32> -> vector<8x32xf32>
    %61 = arith.addf %57, %60 : vector<8x32xf32>
    %c0_40 = arith.constant 0 : index
    %c0_41 = arith.constant 0 : index
    %62 = vector.load %arg13[%c0_40, %c0_41] : memref<8x32xf32, #tpu.memory_space<vmem>>, vector<8x32xf32>
    tpu.vector_store %arg13[%c0_40, %c0_41], %61 {strides = array<i32>} : memref<8x32xf32, #tpu.memory_space<vmem>>, vector<8x32xf32>,
    %c3_i32 = arith.constant 3 : i32
    %63 = arith.cmpi eq, %arg1, %c3_i32 : i32
    %64 = arith.extui %63 : i1 to i32
    %c0_i32_42 = arith.constant 0 : i32
    %65 = arith.cmpi ne, %64, %c0_i32_42 : i32
    scf.if %65 {
      %c0_43 = arith.constant 0 : index
      %c0_44 = arith.constant 0 : index
      %66 = vector.load %arg13[%c0_43, %c0_44] : memref<8x32xf32, #tpu.memory_space<vmem>>, vector<8x32xf32>
      %c0_45 = arith.constant 0 : index
      %c0_46 = arith.constant 0 : index
      %67 = vector.load %arg11[%c0_45, %c0_46] : memref<1x32xf32, #tpu.memory_space<vmem>>, vector<1x32xf32>
      %68 = vector.broadcast %67 : vector<1x32xf32> to vector<8x32xf32>
      %69 = arith.addf %66, %68 : vector<8x32xf32>
      %c0_47 = arith.constant 0 : index
      %c0_48 = arith.constant 0 : index
      %c0_49 = arith.constant 0 : index
      %70 = vector.load %arg12[%c0_47, %c0_48, %c0_49] : memref<1x8x32xf32, #tpu.memory_space<vmem>>, vector<1x8x32xf32>
      %71 = vector.shape_cast %70 : vector<1x8x32xf32> to vector<8x32xf32>
      %72 = vector.shape_cast %69 : vector<8x32xf32> to vector<1x8x32xf32>
      tpu.vector_store %arg12[%c0_47, %c0_48, %c0_49], %72 {strides = array<i32>} : memref<1x8x32xf32, #tpu.memory_space<vmem>>, vector<1x8x32xf32>,
    } else {
    }
    return
  }
  func.func @transform_0(%arg0: i32, %arg1: i32) -> (i32, i32, i32) {
    %c0_i32 = arith.constant 0 : i32
    %c0_i32_0 = arith.constant 0 : i32
    %c0_i32_1 = arith.constant 0 : i32
    return %arg0, %c0_i32, %c0_i32_0 : i32, i32, i32
  }
  func.func @transform_1(%arg0: i32, %arg1: i32) -> (i32, i32, i32) {
    %c0_i32 = arith.constant 0 : i32
    %c0_i32_0 = arith.constant 0 : i32
    %c0_i32_1 = arith.constant 0 : i32
    return %arg1, %c0_i32, %c0_i32_0 : i32, i32, i32
  }
  func.func @transform_2(%arg0: i32, %arg1: i32) -> (i32, i32, i32) {
    %c0_i32 = arith.constant 0 : i32
    %c0_i32_0 = arith.constant 0 : i32
    %c0_i32_1 = arith.constant 0 : i32
    return %arg1, %c0_i32, %c0_i32_0 : i32, i32, i32
  }
  func.func @transform_3(%arg0: i32, %arg1: i32) -> (i32, i32, i32) {
    %c0_i32 = arith.constant 0 : i32
    %c0_i32_0 = arith.constant 0 : i32
    %c0_i32_1 = arith.constant 0 : i32
    return %arg1, %c0_i32, %c0_i32_0 : i32, i32, i32
  }
  func.func @transform_4(%arg0: i32, %arg1: i32) -> (i32, i32, i32) {
    %c0_i32 = arith.constant 0 : i32
    %c0_i32_0 = arith.constant 0 : i32
    %c0_i32_1 = arith.constant 0 : i32
    return %arg1, %c0_i32, %c0_i32_0 : i32, i32, i32
  }
  func.func @transform_5(%arg0: i32, %arg1: i32) -> (i32, i32, i32) {
    %c0_i32 = arith.constant 0 : i32
    %c0_i32_0 = arith.constant 0 : i32
    %c0_i32_1 = arith.constant 0 : i32
    return %arg1, %c0_i32, %c0_i32_0 : i32, i32, i32
  }
  func.func @transform_6(%arg0: i32, %arg1: i32) -> (i32, i32, i32) {
    %c0_i32 = arith.constant 0 : i32
    %c0_i32_0 = arith.constant 0 : i32
    %c0_i32_1 = arith.constant 0 : i32
    return %arg1, %c0_i32, %c0_i32_0 : i32, i32, i32
  }
  func.func @transform_7(%arg0: i32, %arg1: i32) -> (i32, i32, i32) {
    %c0_i32 = arith.constant 0 : i32
    %c0_i32_0 = arith.constant 0 : i32
    %c0_i32_1 = arith.constant 0 : i32
    return %arg0, %c0_i32, %c0_i32_0 : i32, i32, i32
  }
  func.func @transform_8(%arg0: i32, %arg1: i32) -> (i32, i32, i32) {
    %c0_i32 = arith.constant 0 : i32
    %c0_i32_0 = arith.constant 0 : i32
    %c0_i32_1 = arith.constant 0 : i32
    return %arg1, %c0_i32, %c0_i32_0 : i32, i32, i32
  }
  func.func @transform_9(%arg0: i32, %arg1: i32) -> (i32, i32) {
    %c0_i32 = arith.constant 0 : i32
    %c0_i32_0 = arith.constant 0 : i32
    %c0_i32_1 = arith.constant 0 : i32
    return %c0_i32, %c0_i32_0 : i32, i32
  }
  func.func @transform_10(%arg0: i32, %arg1: i32) -> (i32, i32, i32) {
    %c0_i32 = arith.constant 0 : i32
    %c0_i32_0 = arith.constant 0 : i32
    %c0_i32_1 = arith.constant 0 : i32
    return %arg0, %c0_i32, %c0_i32_0 : i32, i32, i32
  }
}

</mosaic_0001>

<llo_original>
// kernel: tpu_custom_call.1
$region0: #{tpu_custom_call.1}
  #allocation0 [shape = 'u32[]', space=smem, size = 0x4, offset = 0x4, fixed_abs, tag = 'smem constant byte address 0x4 - core index']
  #allocation1 [shape = 'u32[144,128]{1,0:T(1,128)}', space=vmem, size = 0x12000, scoped, tag = 'internal scratch']
  #allocation2 [shape = 'f32[8,32]{1,0:T(8,128)}', space=vmem, size = 0x1000, scoped, tag = 'scratch operand']
  %s0 = inlined_call_operand.vmem [shape: f32[2,8,32], index: 0, kind: input, shape index: {}]
  %s1 = inlined_call_operand.vmem [shape: f32[4,32,8], index: 1, kind: input, shape index: {}]
  %s2 = inlined_call_operand.vmem [shape: f32[4,32,8], index: 2, kind: input, shape index: {}]
  %s3 = inlined_call_operand.vmem [shape: f32[4,32,8], index: 3, kind: input, shape index: {}]
  %s4 = inlined_call_operand.vmem [shape: f32[4,1,8], index: 4, kind: input, shape index: {}]
  %s5 = inlined_call_operand.vmem [shape: f32[4,1,8], index: 5, kind: input, shape index: {}]
  %s6 = inlined_call_operand.vmem [shape: f32[4,1,8], index: 6, kind: input, shape index: {}]
  %s7 = inlined_call_operand.vmem [shape: f32[2,1,8], index: 7, kind: input, shape index: {}]
  %s8 = inlined_call_operand.vmem [shape: f32[4,8,32], index: 8, kind: input, shape index: {}]
  %s9 = inlined_call_operand.vmem [shape: f32[1,32], index: 9, kind: input, shape index: {}]
  %s10 = inlined_call_operand.hbm [shape: f32[2,8,32], index: 10, kind: output, shape index: {}]
  %s11 = sld [smem:[#allocation0]]
  $region81: #{tpu_custom_call.1} parent=0
    _
  %s13 = ssub.s32 1, %s11
  %s14 = scalar_select 0, %s13, %s11
  $region1: #{tpu_custom_call.1} parent=0
    #allocation3 [shape = 'u8[8192]{0}', space=vmem, size = 0x2000, scoped, tag = 'output window, operand 0']
    #allocation4 [shape = 's32[2]{0}', space=sflag, size = 0x8, scoped, tag = 'scoped memory for tpu_custom_call.1']
    %15 = vsyncpa [#allocation4], 0
    %s16 = scalar_lea.sflag [#allocation4], 1
    %17 = vsyncpa %s16, 0
    loop: start=0, step=1, limit=10
    $region2: #{tpu_custom_call.1} parent=1 // loop_pre_header
      _
    $region3: #{tpu_custom_call.1} parent=1 // loop_header
      %s19 = sphi 0, %s23
      %p20 = scmp.ge.s32.totalorder %s19, 10
      %s26 = sphi 0, %s38
      %s27 = sphi 0, %s34
      %s28 = sphi 0, %s26
      %s29 = sphi 0, %s27
      %s30 = sphi 0, %s28
      %s31 = sphi 0, %s29
      %s41 = sphi 0, %s43
      %s44 = sphi 0, %s41
      %s45 = sphi 0, %s44
      %s61 = sphi 0, %s45
      %s67 = sphi 0, %s69
      %s70 = sphi 0, %s67
      %s71 = sphi 0, %s70
      %s87 = sphi 0, %s71
      %s93 = sphi 0, %s95
      %s96 = sphi 0, %s93
      %s97 = sphi 0, %s96
      %s113 = sphi 0, %s97
      %s119 = sphi 0, %s121
      %s122 = sphi 0, %s119
      %s123 = sphi 0, %s122
      %s139 = sphi 0, %s123
      %s145 = sphi 0, %s147
      %s148 = sphi 0, %s145
      %s149 = sphi 0, %s148
      %s165 = sphi 0, %s149
      %s171 = sphi 0, %s173
      %s174 = sphi 0, %s171
      %s175 = sphi 0, %s174
      %s191 = sphi 0, %s175
      %s197 = sphi 0, %s199
      %s200 = sphi 0, %s197
      %s201 = sphi 0, %s200
      %s217 = sphi 0, %s201
      %s223 = sphi 0, %s225
      %s226 = sphi 0, %s223
      %s227 = sphi 0, %s226
      %s243 = sphi 0, %s227
      %s249 = sphi 0, %s251
      %s252 = sphi 0, %s249
      %s253 = sphi 0, %s252
      %s269 = sphi 0, %s253
      %s273 = sphi 0, %s273
      %s275 = sphi 0, %s273
      %s276 = sphi 0, %s275
      %s290 = sphi 0, %s276
      %s296 = sphi 0, %s298
      %s299 = sphi 0, %s296
      %s300 = sphi 0, %s299
      %s316 = sphi 0, %s300
    $region4: #{tpu_custom_call.1} parent=1 // loop_header_branch
      %22 = sbr.rel (%p20) target = $region8
    $region5: #{tpu_custom_call.1} parent=1 // loop_body
      %s24 = ssub.s32 %s19, 1
      %s25 = ssub.s32 %s19, 2
      %s32 = sadd.s32 1, %s27
      %p33 = scmp.ge.s32.totalorder %s32, 4
      %s34 = scalar_select %p33, 0, %s32
      %s35 = sadd.s32 1, %s26
      %s36 = scalar_select %p33, %s35, %s26
      %p37 = scmp.ge.s32.totalorder %s36, 2
      %s38 = scalar_select %p37, 0, %s36
      %s39 = ssub.s32 %s26, %s38
      %p40 = scmp.eq.s32.totalorder %s39, 0
      %s42 = sadd.s32 %s41, 1
      %s43 = scalar_select %p40, %s41, %s42
      %p46 = pneg %p40
      %p47 = scmp.eq.s32.totalorder %s19, 7
      %p48 = por %p46, %p47
      %p49 = scmp.ne.s32.totalorder %s41, %s44
      %p50 = scmp.eq.s32.totalorder %s19, 0
      %p51 = por %p49, %p50
      %p52 = scmp.ne.s32.totalorder %s41, %s44
      %p53 = scmp.eq.s32.totalorder %s24, 7
      %p54 = por %p52, %p53
      %p55 = scmp.ne.s32.totalorder %s44, %s45
      %p56 = scmp.eq.s32.totalorder %s24, 0
      %p57 = por %p55, %p56
      %p58 = scmp.ne.s32.totalorder %s44, %s45
      %p59 = scmp.eq.s32.totalorder %s25, 7
      %p60 = por %p58, %p59
      %p62 = scmp.ne.s32.totalorder %s45, %s61
      %p63 = scmp.eq.s32.totalorder %s25, 0
      %p64 = por %p62, %p63
      %s65 = ssub.s32 %s27, %s34
      %p66 = scmp.eq.s32.totalorder %s65, 0
      %s68 = sadd.s32 %s67, 1
      %s69 = scalar_select %p66, %s67, %s68
      %p72 = pneg %p66
      %p73 = scmp.eq.s32.totalorder %s19, 7
      %p74 = por %p72, %p73
      %p75 = scmp.ne.s32.totalorder %s67, %s70
      %p76 = scmp.eq.s32.totalorder %s19, 0
      %p77 = por %p75, %p76
      %p78 = scmp.ne.s32.totalorder %s67, %s70
      %p79 = scmp.eq.s32.totalorder %s24, 7
      %p80 = por %p78, %p79
      %p81 = scmp.ne.s32.totalorder %s70, %s71
      %p82 = scmp.eq.s32.totalorder %s24, 0
      %p83 = por %p81, %p82
      %p84 = scmp.ne.s32.totalorder %s70, %s71
      %p85 = scmp.eq.s32.totalorder %s25, 7
      %p86 = por %p84, %p85
      %p88 = scmp.ne.s32.totalorder %s71, %s87
      %p89 = scmp.eq.s32.totalorder %s25, 0
      %p90 = por %p88, %p89
      %s91 = ssub.s32 %s27, %s34
      %p92 = scmp.eq.s32.totalorder %s91, 0
      %s94 = sadd.s32 %s93, 1
      %s95 = scalar_select %p92, %s93, %s94
      %p98 = pneg %p92
      %p99 = scmp.eq.s32.totalorder %s19, 7
      %p100 = por %p98, %p99
      %p101 = scmp.ne.s32.totalorder %s93, %s96
      %p102 = scmp.eq.s32.totalorder %s19, 0
      %p103 = por %p101, %p102
      %p104 = scmp.ne.s32.totalorder %s93, %s96
      %p105 = scmp.eq.s32.totalorder %s24, 7
      %p106 = por %p104, %p105
      %p107 = scmp.ne.s32.totalorder %s96, %s97
      %p108 = scmp.eq.s32.totalorder %s24, 0
      %p109 = por %p107, %p108
      %p110 = scmp.ne.s32.totalorder %s96, %s97
      %p111 = scmp.eq.s32.totalorder %s25, 7
      %p112 = por %p110, %p111
      %p114 = scmp.ne.s32.totalorder %s97, %s113
      %p115 = scmp.eq.s32.totalorder %s25, 0
      %p116 = por %p114, %p115
      %s117 = ssub.s32 %s27, %s34
      %p118 = scmp.eq.s32.totalorder %s117, 0
      %s120 = sadd.s32 %s119, 1
      %s121 = scalar_select %p118, %s119, %s120
      %p124 = pneg %p118
      %p125 = scmp.eq.s32.totalorder %s19, 7
      %p126 = por %p124, %p125
      %p127 = scmp.ne.s32.totalorder %s119, %s122
      %p128 = scmp.eq.s32.totalorder %s19, 0
      %p129 = por %p127, %p128
      %p130 = scmp.ne.s32.totalorder %s119, %s122
      %p131 = scmp.eq.s32.totalorder %s24, 7
      %p132 = por %p130, %p131
      %p133 = scmp.ne.s32.totalorder %s122, %s123
      %p134 = scmp.eq.s32.totalorder %s24, 0
      %p135 = por %p133, %p134
      %p136 = scmp.ne.s32.totalorder %s122, %s123
      %p137 = scmp.eq.s32.totalorder %s25, 7
      %p138 = por %p136, %p137
      %p140 = scmp.ne.s32.totalorder %s123, %s139
      %p141 = scmp.eq.s32.totalorder %s25, 0
      %p142 = por %p140, %p141
      %s143 = ssub.s32 %s27, %s34
      %p144 = scmp.eq.s32.totalorder %s143, 0
      %s146 = sadd.s32 %s145, 1
      %s147 = scalar_select %p144, %s145, %s146
      %p150 = pneg %p144
      %p151 = scmp.eq.s32.totalorder %s19, 7
      %p152 = por %p150, %p151
      %p153 = scmp.ne.s32.totalorder %s145, %s148
      %p154 = scmp.eq.s32.totalorder %s19, 0
      %p155 = por %p153, %p154
      %p156 = scmp.ne.s32.totalorder %s145, %s148
      %p157 = scmp.eq.s32.totalorder %s24, 7
      %p158 = por %p156, %p157
      %p159 = scmp.ne.s32.totalorder %s148, %s149
      %p160 = scmp.eq.s32.totalorder %s24, 0
      %p161 = por %p159, %p160
      %p162 = scmp.ne.s32.totalorder %s148, %s149
      %p163 = scmp.eq.s32.totalorder %s25, 7
      %p164 = por %p162, %p163
      %p166 = scmp.ne.s32.totalorder %s149, %s165
      %p167 = scmp.eq.s32.totalorder %s25, 0
      %p168 = por %p166, %p167
      %s169 = ssub.s32 %s27, %s34
      %p170 = scmp.eq.s32.totalorder %s169, 0
      %s172 = sadd.s32 %s171, 1
      %s173 = scalar_select %p170, %s171, %s172
      %p176 = pneg %p170
      %p177 = scmp.eq.s32.totalorder %s19, 7
      %p178 = por %p176, %p177
      %p179 = scmp.ne.s32.totalorder %s171, %s174
      %p180 = scmp.eq.s32.totalorder %s19, 0
      %p181 = por %p179, %p180
      %p182 = scmp.ne.s32.totalorder %s171, %s174
      %p183 = scmp.eq.s32.totalorder %s24, 7
      %p184 = por %p182, %p183
      %p185 = scmp.ne.s32.totalorder %s174, %s175
      %p186 = scmp.eq.s32.totalorder %s24, 0
      %p187 = por %p185, %p186
      %p188 = scmp.ne.s32.totalorder %s174, %s175
      %p189 = scmp.eq.s32.totalorder %s25, 7
      %p190 = por %p188, %p189
      %p192 = scmp.ne.s32.totalorder %s175, %s191
      %p193 = scmp.eq.s32.totalorder %s25, 0
      %p194 = por %p192, %p193
      %s195 = ssub.s32 %s27, %s34
      %p196 = scmp.eq.s32.totalorder %s195, 0
      %s198 = sadd.s32 %s197, 1
      %s199 = scalar_select %p196, %s197, %s198
      %p202 = pneg %p196
      %p203 = scmp.eq.s32.totalorder %s19, 7
      %p204 = por %p202, %p203
      %p205 = scmp.ne.s32.totalorder %s197, %s200
      %p206 = scmp.eq.s32.totalorder %s19, 0
      %p207 = por %p205, %p206
      %p208 = scmp.ne.s32.totalorder %s197, %s200
      %p209 = scmp.eq.s32.totalorder %s24, 7
      %p210 = por %p208, %p209
      %p211 = scmp.ne.s32.totalorder %s200, %s201
      %p212 = scmp.eq.s32.totalorder %s24, 0
      %p213 = por %p211, %p212
      %p214 = scmp.ne.s32.totalorder %s200, %s201
      %p215 = scmp.eq.s32.totalorder %s25, 7
      %p216 = por %p214, %p215
      %p218 = scmp.ne.s32.totalorder %s201, %s217
      %p219 = scmp.eq.s32.totalorder %s25, 0
      %p220 = por %p218, %p219
      %s221 = ssub.s32 %s26, %s38
      %p222 = scmp.eq.s32.totalorder %s221, 0
      %s224 = sadd.s32 %s223, 1
      %s225 = scalar_select %p222, %s223, %s224
      %p228 = pneg %p222
      %p229 = scmp.eq.s32.totalorder %s19, 7
      %p230 = por %p228, %p229
      %p231 = scmp.ne.s32.totalorder %s223, %s226
      %p232 = scmp.eq.s32.totalorder %s19, 0
      %p233 = por %p231, %p232
      %p234 = scmp.ne.s32.totalorder %s223, %s226
      %p235 = scmp.eq.s32.totalorder %s24, 7
      %p236 = por %p234, %p235
      %p237 = scmp.ne.s32.totalorder %s226, %s227
      %p238 = scmp.eq.s32.totalorder %s24, 0
      %p239 = por %p237, %p238
      %p240 = scmp.ne.s32.totalorder %s226, %s227
      %p241 = scmp.eq.s32.totalorder %s25, 7
      %p242 = por %p240, %p241
      %p244 = scmp.ne.s32.totalorder %s227, %s243
      %p245 = scmp.eq.s32.totalorder %s25, 0
      %p246 = por %p244, %p245
      %s247 = ssub.s32 %s27, %s34
      %p248 = scmp.eq.s32.totalorder %s247, 0
      %s250 = sadd.s32 %s249, 1
      %s251 = scalar_select %p248, %s249, %s250
      %p254 = pneg %p248
      %p255 = scmp.eq.s32.totalorder %s19, 7
      %p256 = por %p254, %p255
      %p257 = scmp.ne.s32.totalorder %s249, %s252
      %p258 = scmp.eq.s32.totalorder %s19, 0
      %p259 = por %p257, %p258
      %p260 = scmp.ne.s32.totalorder %s249, %s252
      %p261 = scmp.eq.s32.totalorder %s24, 7
      %p262 = por %p260, %p261
      %p263 = scmp.ne.s32.totalorder %s252, %s253
      %p264 = scmp.eq.s32.totalorder %s24, 0
      %p265 = por %p263, %p264
      %p266 = scmp.ne.s32.totalorder %s252, %s253
      %p267 = scmp.eq.s32.totalorder %s25, 7
      %p268 = por %p266, %p267
      %p270 = scmp.ne.s32.totalorder %s253, %s269
      %p271 = scmp.eq.s32.totalorder %s25, 0
      %p272 = por %p270, %p271
      %s274 = sadd.s32 %s273, 1
      %p277 = scmp.eq.s32.totalorder %s19, 7
      %p278 = scmp.ne.s32.totalorder %s273, %s275
      %p279 = scmp.eq.s32.totalorder %s19, 0
      %p280 = por %p278, %p279
      %p281 = scmp.ne.s32.totalorder %s273, %s275
      %p282 = scmp.eq.s32.totalorder %s24, 7
      %p283 = por %p281, %p282
      %p284 = scmp.ne.s32.totalorder %s275, %s276
      %p285 = scmp.eq.s32.totalorder %s24, 0
      %p286 = por %p284, %p285
      %p287 = scmp.ne.s32.totalorder %s275, %s276
      %p288 = scmp.eq.s32.totalorder %s25, 7
      %p289 = por %p287, %p288
      %p291 = scmp.ne.s32.totalorder %s276, %s290
      %p292 = scmp.eq.s32.totalorder %s25, 0
      %p293 = por %p291, %p292
      %s294 = ssub.s32 %s26, %s38
      %p295 = scmp.eq.s32.totalorder %s294, 0
      %s297 = sadd.s32 %s296, 1
      %s298 = scalar_select %p295, %s296, %s297
      %p301 = pneg %p295
      %p302 = scmp.eq.s32.totalorder %s19, 7
      %p303 = por %p301, %p302
      %p304 = scmp.ne.s32.totalorder %s296, %s299
      %p305 = scmp.eq.s32.totalorder %s19, 0
      %p306 = por %p304, %p305
      %p307 = scmp.ne.s32.totalorder %s296, %s299
      %p308 = scmp.eq.s32.totalorder %s24, 7
      %p309 = por %p307, %p308
      %p310 = scmp.ne.s32.totalorder %s299, %s300
      %p311 = scmp.eq.s32.totalorder %s24, 0
      %p312 = por %p310, %p311
      %p313 = scmp.ne.s32.totalorder %s299, %s300
      %p314 = scmp.eq.s32.totalorder %s25, 7
      %p315 = por %p313, %p314
      %p317 = scmp.ne.s32.totalorder %s300, %s316
      %p318 = scmp.eq.s32.totalorder %s25, 0
      %p319 = por %p317, %p318
      %p320 = scmp.le.s32.totalorder 1, %s19
      %p321 = scmp.lt.s32.totalorder %s19, 9
      %p322 = pnand %p320, %p321
      %p323 = pneg %p322
      // Predicated region
      $region9: #{tpu_custom_call.1} parent=5 // pred_check
        _
      $region10: #{tpu_custom_call.1} parent=5 // pred_check_branch
        %325 = sbr.rel (%p322) target = $region12
      $region11: #{tpu_custom_call.1} parent=5 // pred_region
        %s326 = ssub.s32 %s19, 1
        // Predicated region
        $region13: #{tpu_custom_call.1} parent=11 // pred_check
          %p327 = pneg %p286
        $region14: #{tpu_custom_call.1} parent=11 // pred_check_branch
          %329 = sbr.rel (%p327) target = $region16
        $region15: #{tpu_custom_call.1} parent=11 // pred_region
          _
        $region16: #{tpu_custom_call.1} parent=11 // pred_fallthru
          _
      $region12: #{tpu_custom_call.1} parent=5 // pred_fallthru
        _
      %p330 = scmp.lt.s32.totalorder %s19, 8
      // Predicated region
      $region17: #{tpu_custom_call.1} parent=5 // pred_check
        %p331 = pneg %p330
      $region18: #{tpu_custom_call.1} parent=5 // pred_check_branch
        %333 = sbr.rel (%p331) target = $region20
      $region19: #{tpu_custom_call.1} parent=5 // pred_region
        // Predicated region
        $region21: #{tpu_custom_call.1} parent=19 // pred_check
          %p334 = pneg %p51
        $region22: #{tpu_custom_call.1} parent=19 // pred_check_branch
          %336 = sbr.rel (%p334) target = $region24
        $region23: #{tpu_custom_call.1} parent=19 // pred_region
          %p337 = scmp.lt.s32.totalorder %s26, 1
          %s338 = scalar_select %p337, %s26, 1
          %s339 = smul.addr %s338, 8
          %s340 = scalar_lea.vmem %s0, %s339
        $region24: #{tpu_custom_call.1} parent=19 // pred_fallthru
          _
        // Predicated region
        $region25: #{tpu_custom_call.1} parent=19 // pred_check
          %p341 = pneg %p77
        $region26: #{tpu_custom_call.1} parent=19 // pred_check_branch
          %343 = sbr.rel (%p341) target = $region28
        $region27: #{tpu_custom_call.1} parent=19 // pred_region
          %p344 = scmp.lt.s32.totalorder %s27, 3
          %s345 = scalar_select %p344, %s27, 3
          %s346 = smul.addr %s345, 4
          %s347 = smul.addr %s346, 8
          %s348 = scalar_lea.vmem %s1, %s347
        $region28: #{tpu_custom_call.1} parent=19 // pred_fallthru
          _
        // Predicated region
        $region29: #{tpu_custom_call.1} parent=19 // pred_check
          %p349 = pneg %p103
        $region30: #{tpu_custom_call.1} parent=19 // pred_check_branch
          %351 = sbr.rel (%p349) target = $region32
        $region31: #{tpu_custom_call.1} parent=19 // pred_region
          %p352 = scmp.lt.s32.totalorder %s27, 3
          %s353 = scalar_select %p352, %s27, 3
          %s354 = smul.addr %s353, 4
          %s355 = smul.addr %s354, 8
          %s356 = scalar_lea.vmem %s2, %s355
        $region32: #{tpu_custom_call.1} parent=19 // pred_fallthru
          _
        // Predicated region
        $region33: #{tpu_custom_call.1} parent=19 // pred_check
          %p357 = pneg %p129
        $region34: #{tpu_custom_call.1} parent=19 // pred_check_branch
          %359 = sbr.rel (%p357) target = $region36
        $region35: #{tpu_custom_call.1} parent=19 // pred_region
          %p360 = scmp.lt.s32.totalorder %s27, 3
          %s361 = scalar_select %p360, %s27, 3
          %s362 = smul.addr %s361, 4
          %s363 = smul.addr %s362, 8
          %s364 = scalar_lea.vmem %s3, %s363
        $region36: #{tpu_custom_call.1} parent=19 // pred_fallthru
          _
        // Predicated region
        $region37: #{tpu_custom_call.1} parent=19 // pred_check
          %p365 = pneg %p155
        $region38: #{tpu_custom_call.1} parent=19 // pred_check_branch
          %367 = sbr.rel (%p365) target = $region40
        $region39: #{tpu_custom_call.1} parent=19 // pred_region
          %p368 = scmp.lt.s32.totalorder %s27, 3
          %s369 = scalar_select %p368, %s27, 3
          %s370 = scalar_lea.vmem %s4, %s369
        $region40: #{tpu_custom_call.1} parent=19 // pred_fallthru
          _
        // Predicated region
        $region41: #{tpu_custom_call.1} parent=19 // pred_check
          %p371 = pneg %p181
        $region42: #{tpu_custom_call.1} parent=19 // pred_check_branch
          %373 = sbr.rel (%p371) target = $region44
        $region43: #{tpu_custom_call.1} parent=19 // pred_region
          %p374 = scmp.lt.s32.totalorder %s27, 3
          %s375 = scalar_select %p374, %s27, 3
          %s376 = scalar_lea.vmem %s5, %s375
        $region44: #{tpu_custom_call.1} parent=19 // pred_fallthru
          _
        // Predicated region
        $region45: #{tpu_custom_call.1} parent=19 // pred_check
          %p377 = pneg %p207
        $region46: #{tpu_custom_call.1} parent=19 // pred_check_branch
          %379 = sbr.rel (%p377) target = $region48
        $region47: #{tpu_custom_call.1} parent=19 // pred_region
          %p380 = scmp.lt.s32.totalorder %s27, 3
          %s381 = scalar_select %p380, %s27, 3
          %s382 = scalar_lea.vmem %s6, %s381
        $region48: #{tpu_custom_call.1} parent=19 // pred_fallthru
          _
        // Predicated region
        $region49: #{tpu_custom_call.1} parent=19 // pred_check
          %p383 = pneg %p233
        $region50: #{tpu_custom_call.1} parent=19 // pred_check_branch
          %385 = sbr.rel (%p383) target = $region52
        $region51: #{tpu_custom_call.1} parent=19 // pred_region
          %p386 = scmp.lt.s32.totalorder %s26, 1
          %s387 = scalar_select %p386, %s26, 1
          %s388 = scalar_lea.vmem %s7, %s387
        $region52: #{tpu_custom_call.1} parent=19 // pred_fallthru
          _
        // Predicated region
        $region53: #{tpu_custom_call.1} parent=19 // pred_check
          %p389 = pneg %p259
        $region54: #{tpu_custom_call.1} parent=19 // pred_check_branch
          %391 = sbr.rel (%p389) target = $region56
        $region55: #{tpu_custom_call.1} parent=19 // pred_region
          %p392 = scmp.lt.s32.totalorder %s27, 3
          %s393 = scalar_select %p392, %s27, 3
          %s394 = smul.addr %s393, 8
          %s395 = scalar_lea.vmem %s8, %s394
        $region56: #{tpu_custom_call.1} parent=19 // pred_fallthru
          _
      $region20: #{tpu_custom_call.1} parent=5 // pred_fallthru
        _
      %p396 = scmp.le.s32.totalorder 1, %s19
      %p397 = scmp.lt.s32.totalorder %s19, 9
      %p398 = pnand %p396, %p397
      %p399 = pneg %p398
      // Predicated region
      $region57: #{tpu_custom_call.1} parent=5 // pred_check
        _
      $region58: #{tpu_custom_call.1} parent=5 // pred_check_branch
        %401 = sbr.rel (%p398) target = $region60
      $region59: #{tpu_custom_call.1} parent=5 // pred_region
        %s402 = ssub.s32 %s19, 1
        %p403 = scmp.lt.s32.totalorder %s28, 1
        %s404 = scalar_select %p403, %s28, 1
        %s405 = smul.addr %s404, 8
        %s406 = scalar_lea.vmem %s0, %s405
        %p407 = pneg %p57
        %p408 = pneg %p54
        %p409 = scmp.lt.s32.totalorder %s29, 3
        %s410 = scalar_select %p409, %s29, 3
        %s411 = smul.addr %s410, 4
        %s412 = smul.addr %s411, 8
        %s413 = scalar_lea.vmem %s1, %s412
        %p414 = pneg %p83
        %p415 = pneg %p80
        %p416 = scmp.lt.s32.totalorder %s29, 3
        %s417 = scalar_select %p416, %s29, 3
        %s418 = smul.addr %s417, 4
        %s419 = smul.addr %s418, 8
        %s420 = scalar_lea.vmem %s2, %s419
        %p421 = pneg %p109
        %p422 = pneg %p106
        %p423 = scmp.lt.s32.totalorder %s29, 3
        %s424 = scalar_select %p423, %s29, 3
        %s425 = smul.addr %s424, 4
        %s426 = smul.addr %s425, 8
        %s427 = scalar_lea.vmem %s3, %s426
        %p428 = pneg %p135
        %p429 = pneg %p132
        %p430 = scmp.lt.s32.totalorder %s29, 3
        %s431 = scalar_select %p430, %s29, 3
        %s432 = scalar_lea.vmem %s4, %s431
        %p433 = pneg %p161
        %p434 = pneg %p158
        %p435 = scmp.lt.s32.totalorder %s29, 3
        %s436 = scalar_select %p435, %s29, 3
        %s437 = scalar_lea.vmem %s5, %s436
        %p438 = pneg %p187
        %p439 = pneg %p184
        %p440 = scmp.lt.s32.totalorder %s29, 3
        %s441 = scalar_select %p440, %s29, 3
        %s442 = scalar_lea.vmem %s6, %s441
        %p443 = pneg %p213
        %p444 = pneg %p210
        %p445 = scmp.lt.s32.totalorder %s28, 1
        %s446 = scalar_select %p445, %s28, 1
        %s447 = scalar_lea.vmem %s7, %s446
        %p448 = pneg %p239
        %p449 = pneg %p236
        %p450 = scmp.lt.s32.totalorder %s29, 3
        %s451 = scalar_select %p450, %s29, 3
        %s452 = smul.addr %s451, 8
        %s453 = scalar_lea.vmem %s8, %s452
        %p454 = pneg %p265
        %p455 = pneg %p262
        %p456 = pneg %p286
        %p457 = pneg %p283
        %p458 = pneg %p312
        %p459 = pneg %p309
        %s460 = sand.u32 %s299, 1
        %s461 = scalar_lea.sflag [#allocation4], %s460
        %s462 = sand.u32 %s299, 1
        %s463 = smul.addr %s462, 8
        %s464 = scalar_lea.vmem [#allocation3], %s463
        %p465 = scmp.lt.s32.totalorder %s28, 1
        %s466 = scalar_select %p465, %s28, 1
        %s467 = smul.addr %s466, 8
        %s468 = scalar_lea.vmem %s0, %s467
        %p469 = scmp.lt.s32.totalorder %s29, 3
        %s470 = scalar_select %p469, %s29, 3
        %s471 = smul.addr %s470, 4
        %s472 = smul.addr %s471, 8
        %s473 = scalar_lea.vmem %s1, %s472
        %p474 = scmp.lt.s32.totalorder %s29, 3
        %s475 = scalar_select %p474, %s29, 3
        %s476 = smul.addr %s475, 4
        %s477 = smul.addr %s476, 8
        %s478 = scalar_lea.vmem %s2, %s477
        %p479 = scmp.lt.s32.totalorder %s29, 3
        %s480 = scalar_select %p479, %s29, 3
        %s481 = smul.addr %s480, 4
        %s482 = smul.addr %s481, 8
        %s483 = scalar_lea.vmem %s3, %s482
        %p484 = scmp.lt.s32.totalorder %s29, 3
        %s485 = scalar_select %p484, %s29, 3
        %s486 = scalar_lea.vmem %s4, %s485
        %p487 = scmp.lt.s32.totalorder %s29, 3
        %s488 = scalar_select %p487, %s29, 3
        %s489 = scalar_lea.vmem %s5, %s488
        %p490 = scmp.lt.s32.totalorder %s29, 3
        %s491 = scalar_select %p490, %s29, 3
        %s492 = scalar_lea.vmem %s6, %s491
        %p493 = scmp.lt.s32.totalorder %s28, 1
        %s494 = scalar_select %p493, %s28, 1
        %s495 = scalar_lea.vmem %s7, %s494
        %p496 = scmp.lt.s32.totalorder %s29, 3
        %s497 = scalar_select %p496, %s29, 3
        %s498 = smul.addr %s497, 8
        %s499 = scalar_lea.vmem %s8, %s498
        %p500 = scmp.eq.s32.totalorder %s29, 0
        // Predicated region
        $region61: #{tpu_custom_call.1} parent=59 // pred_check
          %p501 = pneg %p500
        $region62: #{tpu_custom_call.1} parent=59 // pred_check_branch
          %503 = sbr.rel (%p501) target = $region64
        $region63: #{tpu_custom_call.1} parent=59 // pred_region
          %vm504 = vcmask 261120
          %505 = vst.msk [vmem:[#allocation2] sm:$0xff] %vm504, 0.0
        $region64: #{tpu_custom_call.1} parent=59 // pred_fallthru
          _
        %v506 = vld [vmem:[%s468] sm:$0xff]
        %v507 = vld [vmem:[%s473] sm:$0xff]
        %v508 = vld [vmem:[%s473 + $0x8] sm:$0xff]
        %v509 = vld [vmem:[%s473 + $0x10] sm:$0xff]
        %v510 = vld [vmem:[%s473 + $0x18] sm:$0xff]
        %v511 = vld [vmem:[%s486] sm:$0x1]
        %v513 = vlaneseq
        %v514 = vshrl.u32 %v513, 7
        %v515 = vsub.s32 0, %v514
        %v516 = vrot.slane %v511, %v515
        %vm518 = vcmask 261120
        %v520 = vsel %vm518, %v506, 0
        %522 = vmatprep.subr.mxu0 0.0
        %523 = vmatpush1.msra.mxu0 0.0
        %524 = vmatprep.subr.mxu0 0.0
        %525 = vmatpush1.msra.mxu0 0.0
        %526 = vmatprep.subr.mxu0 0.0
        %527 = vmatpush1.msra.mxu0 0.0
        %528 = vmatprep.subr.mxu0 0.0
        %529 = vmatpush1.msra.mxu0 0.0
        %530 = vmatprep.subr.mxu0 0.0
        %531 = vmatpush1.msra.mxu0 0.0
        %532 = vmatprep.subr.mxu0 0.0
        %533 = vmatpush1.msra.mxu0 0.0
        %534 = vmatprep.subr.mxu0 0.0
        %535 = vmatpush1.msra.mxu0 0.0
        %536 = vmatprep.subr.mxu0 0.0
        %537 = vmatpush1.msra.mxu0 0.0
        %538 = vmatprep.subr.mxu0 0.0
        %539 = vmatpush1.msra.mxu0 0.0
        %540 = vmatprep.subr.mxu0 0.0
        %541 = vmatpush1.msra.mxu0 0.0
        %542 = vmatprep.subr.mxu0 0.0
        %543 = vmatpush1.msra.mxu0 0.0
        %544 = vmatprep.subr.mxu0 0.0
        %545 = vmatpush1.msra.mxu0 0.0
        %546 = vmatprep.subr.mxu0 0.0
        %547 = vmatpush1.msra.mxu0 %v510
        %548 = vmatprep.subr.mxu0 0.0
        %549 = vmatpush1.msra.mxu0 %v509
        %550 = vmatprep.subr.mxu0 0.0
        %551 = vmatpush1.msra.mxu0 %v508
        %552 = vmatprep.subr.mxu0 0.0
        %553 = vmatpush1.msra.mxu0 %v507
        %554 = vmatprep.subr.mxu0 0.0
        %555 = vmatpush2.msra.mxu0 0.0
        %556 = vmatprep.subr.mxu0 0.0
        %557 = vmatpush2.msra.mxu0 0.0
        %558 = vmatprep.subr.mxu0 0.0
        %559 = vmatpush2.msra.mxu0 0.0
        %560 = vmatprep.subr.mxu0 0.0
        %561 = vmatpush2.msra.mxu0 0.0
        %562 = vmatprep.subr.mxu0 0.0
        %563 = vmatpush2.msra.mxu0 0.0
        %564 = vmatprep.subr.mxu0 0.0
        %565 = vmatpush2.msra.mxu0 0.0
        %566 = vmatprep.subr.mxu0 0.0
        %567 = vmatpush2.msra.mxu0 0.0
        %568 = vmatprep.subr.mxu0 0.0
        %569 = vmatpush2.msra.mxu0 0.0
        %570 = vmatprep.subr.mxu0 0.0
        %571 = vmatpush2.msra.mxu0 0.0
        %572 = vmatprep.subr.mxu0 0.0
        %573 = vmatpush2.msra.mxu0 0.0
        %574 = vmatprep.subr.mxu0 0.0
        %575 = vmatpush2.msra.mxu0 0.0
        %576 = vmatprep.subr.mxu0 0.0
        %577 = vmatpush2.msra.mxu0 0.0
        %578 = vmatprep.subr.mxu0 0.0
        %579 = vmatpush2.msra.mxu0 0.0
        %580 = vmatprep.subr.mxu0 0.0
        %581 = vmatpush2.msra.mxu0 0.0
        %582 = vmatprep.subr.mxu0 0.0
        %583 = vmatpush2.msra.mxu0 0.0
        %584 = vmatprep.subr.mxu0 0.0
        %585 = vmatpush2.msra.mxu0 0.0
        %586 = vmatprep.mubr.f32.mxu0 0.0
        %587 = vmatmul.mubr.f32.gmra.mxu0 %v520
        %v588 = vpop.f32.mrf.mxu0
        %v589 = vadd.f32 %v516, %v588
        %v590 = vpop.f32.mrf.mxu0
        %591 = vdwg.mxu0
        %v592 = vld [vmem:[%s478] sm:$0xff]
        %v593 = vld [vmem:[%s478 + $0x8] sm:$0xff]
        %v594 = vld [vmem:[%s478 + $0x10] sm:$0xff]
        %v595 = vld [vmem:[%s478 + $0x18] sm:$0xff]
        %v596 = vld [vmem:[%s489] sm:$0x1]
        %v598 = vlaneseq
        %v599 = vshrl.u32 %v598, 7
        %v600 = vsub.s32 0, %v599
        %v601 = vrot.slane %v596, %v600
        %603 = vmatprep.subr.mxu0 0.0
        %604 = vmatpush1.msra.mxu0 0.0
        %605 = vmatprep.subr.mxu0 0.0
        %606 = vmatpush1.msra.mxu0 0.0
        %607 = vmatprep.subr.mxu0 0.0
        %608 = vmatpush1.msra.mxu0 0.0
        %609 = vmatprep.subr.mxu0 0.0
        %610 = vmatpush1.msra.mxu0 0.0
        %611 = vmatprep.subr.mxu0 0.0
        %612 = vmatpush1.msra.mxu0 0.0
        %613 = vmatprep.subr.mxu0 0.0
        %614 = vmatpush1.msra.mxu0 0.0
        %615 = vmatprep.subr.mxu0 0.0
        %616 = vmatpush1.msra.mxu0 0.0
        %617 = vmatprep.subr.mxu0 0.0
        %618 = vmatpush1.msra.mxu0 0.0
        %619 = vmatprep.subr.mxu0 0.0
        %620 = vmatpush1.msra.mxu0 0.0
        %621 = vmatprep.subr.mxu0 0.0
        %622 = vmatpush1.msra.mxu0 0.0
        %623 = vmatprep.subr.mxu0 0.0
        %624 = vmatpush1.msra.mxu0 0.0
        %625 = vmatprep.subr.mxu0 0.0
        %626 = vmatpush1.msra.mxu0 0.0
        %627 = vmatprep.subr.mxu0 0.0
        %628 = vmatpush1.msra.mxu0 %v595
        %629 = vmatprep.subr.mxu0 0.0
        %630 = vmatpush1.msra.mxu0 %v594
        %631 = vmatprep.subr.mxu0 0.0
        %632 = vmatpush1.msra.mxu0 %v593
        %633 = vmatprep.subr.mxu0 0.0
        %634 = vmatpush1.msra.mxu0 %v592
        %635 = vmatprep.subr.mxu0 0.0
        %636 = vmatpush2.msra.mxu0 0.0
        %637 = vmatprep.subr.mxu0 0.0
        %638 = vmatpush2.msra.mxu0 0.0
        %639 = vmatprep.subr.mxu0 0.0
        %640 = vmatpush2.msra.mxu0 0.0
        %641 = vmatprep.subr.mxu0 0.0
        %642 = vmatpush2.msra.mxu0 0.0
        %643 = vmatprep.subr.mxu0 0.0
        %644 = vmatpush2.msra.mxu0 0.0
        %645 = vmatprep.subr.mxu0 0.0
        %646 = vmatpush2.msra.mxu0 0.0
        %647 = vmatprep.subr.mxu0 0.0
        %648 = vmatpush2.msra.mxu0 0.0
        %649 = vmatprep.subr.mxu0 0.0
        %650 = vmatpush2.msra.mxu0 0.0
        %651 = vmatprep.subr.mxu0 0.0
        %652 = vmatpush2.msra.mxu0 0.0
        %653 = vmatprep.subr.mxu0 0.0
        %654 = vmatpush2.msra.mxu0 0.0
        %655 = vmatprep.subr.mxu0 0.0
        %656 = vmatpush2.msra.mxu0 0.0
        %657 = vmatprep.subr.mxu0 0.0
        %658 = vmatpush2.msra.mxu0 0.0
        %659 = vmatprep.subr.mxu0 0.0
        %660 = vmatpush2.msra.mxu0 0.0
        %661 = vmatprep.subr.mxu0 0.0
        %662 = vmatpush2.msra.mxu0 0.0
        %663 = vmatprep.subr.mxu0 0.0
        %664 = vmatpush2.msra.mxu0 0.0
        %665 = vmatprep.subr.mxu0 0.0
        %666 = vmatpush2.msra.mxu0 0.0
        %667 = vmatprep.mubr.f32.mxu0 0.0
        %668 = vmatmul.mubr.f32.gmra.mxu0 %v520
        %v669 = vpop.f32.mrf.mxu0
        %v670 = vadd.f32 %v601, %v669
        %v671 = vpop.f32.mrf.mxu0
        %672 = vdwg.mxu0
        %v673 = vld [vmem:[%s483] sm:$0xff]
        %v674 = vld [vmem:[%s483 + $0x8] sm:$0xff]
        %v675 = vld [vmem:[%s483 + $0x10] sm:$0xff]
        %v676 = vld [vmem:[%s483 + $0x18] sm:$0xff]
        %v677 = vld [vmem:[%s492] sm:$0x1]
        %v679 = vlaneseq
        %v680 = vshrl.u32 %v679, 7
        %v681 = vsub.s32 0, %v680
        %v682 = vrot.slane %v677, %v681
        %684 = vmatprep.subr.mxu0 0.0
        %685 = vmatpush1.msra.mxu0 0.0
        %686 = vmatprep.subr.mxu0 0.0
        %687 = vmatpush1.msra.mxu0 0.0
        %688 = vmatprep.subr.mxu0 0.0
        %689 = vmatpush1.msra.mxu0 0.0
        %690 = vmatprep.subr.mxu0 0.0
        %691 = vmatpush1.msra.mxu0 0.0
        %692 = vmatprep.subr.mxu0 0.0
        %693 = vmatpush1.msra.mxu0 0.0
        %694 = vmatprep.subr.mxu0 0.0
        %695 = vmatpush1.msra.mxu0 0.0
        %696 = vmatprep.subr.mxu0 0.0
        %697 = vmatpush1.msra.mxu0 0.0
        %698 = vmatprep.subr.mxu0 0.0
        %699 = vmatpush1.msra.mxu0 0.0
        %700 = vmatprep.subr.mxu0 0.0
        %701 = vmatpush1.msra.mxu0 0.0
        %702 = vmatprep.subr.mxu0 0.0
        %703 = vmatpush1.msra.mxu0 0.0
        %704 = vmatprep.subr.mxu0 0.0
        %705 = vmatpush1.msra.mxu0 0.0
        %706 = vmatprep.subr.mxu0 0.0
        %707 = vmatpush1.msra.mxu0 0.0
        %708 = vmatprep.subr.mxu0 0.0
        %709 = vmatpush1.msra.mxu0 %v676
        %710 = vmatprep.subr.mxu0 0.0
        %711 = vmatpush1.msra.mxu0 %v675
        %712 = vmatprep.subr.mxu0 0.0
        %713 = vmatpush1.msra.mxu0 %v674
        %714 = vmatprep.subr.mxu0 0.0
        %715 = vmatpush1.msra.mxu0 %v673
        %716 = vmatprep.subr.mxu0 0.0
        %717 = vmatpush2.msra.mxu0 0.0
        %718 = vmatprep.subr.mxu0 0.0
        %719 = vmatpush2.msra.mxu0 0.0
        %720 = vmatprep.subr.mxu0 0.0
        %721 = vmatpush2.msra.mxu0 0.0
        %722 = vmatprep.subr.mxu0 0.0
        %723 = vmatpush2.msra.mxu0 0.0
        %724 = vmatprep.subr.mxu0 0.0
        %725 = vmatpush2.msra.mxu0 0.0
        %726 = vmatprep.subr.mxu0 0.0
        %727 = vmatpush2.msra.mxu0 0.0
        %728 = vmatprep.subr.mxu0 0.0
        %729 = vmatpush2.msra.mxu0 0.0
        %730 = vmatprep.subr.mxu0 0.0
        %731 = vmatpush2.msra.mxu0 0.0
        %732 = vmatprep.subr.mxu0 0.0
        %733 = vmatpush2.msra.mxu0 0.0
        %734 = vmatprep.subr.mxu0 0.0
        %735 = vmatpush2.msra.mxu0 0.0
        %736 = vmatprep.subr.mxu0 0.0
        %737 = vmatpush2.msra.mxu0 0.0
        %738 = vmatprep.subr.mxu0 0.0
        %739 = vmatpush2.msra.mxu0 0.0
        %740 = vmatprep.subr.mxu0 0.0
        %741 = vmatpush2.msra.mxu0 0.0
        %742 = vmatprep.subr.mxu0 0.0
        %743 = vmatpush2.msra.mxu0 0.0
        %744 = vmatprep.subr.mxu0 0.0
        %745 = vmatpush2.msra.mxu0 0.0
        %746 = vmatprep.subr.mxu0 0.0
        %747 = vmatpush2.msra.mxu0 0.0
        %748 = vmatprep.mubr.f32.mxu0 0.0
        %749 = vmatmul.mubr.f32.gmra.mxu0 %v520
        %v750 = vpop.f32.mrf.mxu0
        %v751 = vadd.f32 %v682, %v750
        %v752 = vpop.f32.mrf.mxu0
        %753 = vdwg.mxu0
        %vm754 = vcmask 64512
        %v756 = vsel %vm754, %v589, 0
        %v759 = vsel %vm754, %v670, 0
        %761 = vmatprep.subr.mxu0 0.0
        %762 = vmatpush1.xpose.msra.mxu0 0.0
        %763 = vmatprep.subr.mxu0 0.0
        %764 = vmatpush1.xpose.msra.mxu0 0.0
        %765 = vmatprep.subr.mxu0 0.0
        %766 = vmatpush1.xpose.msra.mxu0 0.0
        %767 = vmatprep.subr.mxu0 0.0
        %768 = vmatpush1.xpose.msra.mxu0 0.0
        %769 = vmatprep.subr.mxu0 0.0
        %770 = vmatpush1.xpose.msra.mxu0 0.0
        %771 = vmatprep.subr.mxu0 0.0
        %772 = vmatpush1.xpose.msra.mxu0 0.0
        %773 = vmatprep.subr.mxu0 0.0
        %774 = vmatpush1.xpose.msra.mxu0 0.0
        %775 = vmatprep.subr.mxu0 0.0
        %776 = vmatpush1.xpose.msra.mxu0 0.0
        %777 = vmatprep.subr.mxu0 0.0
        %778 = vmatpush1.xpose.msra.mxu0 0.0
        %779 = vmatprep.subr.mxu0 0.0
        %780 = vmatpush1.xpose.msra.mxu0 0.0
        %781 = vmatprep.subr.mxu0 0.0
        %782 = vmatpush1.xpose.msra.mxu0 0.0
        %783 = vmatprep.subr.mxu0 0.0
        %784 = vmatpush1.xpose.msra.mxu0 0.0
        %785 = vmatprep.subr.mxu0 0.0
        %786 = vmatpush1.xpose.msra.mxu0 0.0
        %787 = vmatprep.subr.mxu0 0.0
        %788 = vmatpush1.xpose.msra.mxu0 0.0
        %789 = vmatprep.subr.mxu0 0.0
        %790 = vmatpush1.xpose.msra.mxu0 0.0
        %791 = vmatprep.subr.mxu0 0.0
        %792 = vmatpush1.xpose.msra.mxu0 %v759
        %793 = vmatprep.subr.mxu0 0.0
        %794 = vmatpush2.xpose.msra.mxu0 0.0
        %795 = vmatprep.subr.mxu0 0.0
        %796 = vmatpush2.xpose.msra.mxu0 0.0
        %797 = vmatprep.subr.mxu0 0.0
        %798 = vmatpush2.xpose.msra.mxu0 0.0
        %799 = vmatprep.subr.mxu0 0.0
        %800 = vmatpush2.xpose.msra.mxu0 0.0
        %801 = vmatprep.subr.mxu0 0.0
        %802 = vmatpush2.xpose.msra.mxu0 0.0
        %803 = vmatprep.subr.mxu0 0.0
        %804 = vmatpush2.xpose.msra.mxu0 0.0
        %805 = vmatprep.subr.mxu0 0.0
        %806 = vmatpush2.xpose.msra.mxu0 0.0
        %807 = vmatprep.subr.mxu0 0.0
        %808 = vmatpush2.xpose.msra.mxu0 0.0
        %809 = vmatprep.subr.mxu0 0.0
        %810 = vmatpush2.xpose.msra.mxu0 0.0
        %811 = vmatprep.subr.mxu0 0.0
        %812 = vmatpush2.xpose.msra.mxu0 0.0
        %813 = vmatprep.subr.mxu0 0.0
        %814 = vmatpush2.xpose.msra.mxu0 0.0
        %815 = vmatprep.subr.mxu0 0.0
        %816 = vmatpush2.xpose.msra.mxu0 0.0
        %817 = vmatprep.subr.mxu0 0.0
        %818 = vmatpush2.xpose.msra.mxu0 0.0
        %819 = vmatprep.subr.mxu0 0.0
        %820 = vmatpush2.xpose.msra.mxu0 0.0
        %821 = vmatprep.subr.mxu0 0.0
        %822 = vmatpush2.xpose.msra.mxu0 0.0
        %823 = vmatprep.subr.mxu0 0.0
        %824 = vmatpush2.xpose.msra.mxu0 0.0
        %825 = vmatprep.mubr.f32.mxu0 0.0
        %826 = vmatmul.mubr.f32.gmra.mxu0 %v756
        %v827 = vpop.f32.mrf.mxu0
        %v828 = vadd.f32 0.0, %v827
        %v829 = vpop.f32.mrf.mxu0
        %830 = vdwg.mxu0
        %v831 = vmul.f32 %v828, 0.35355338
        %v832 = vsel %vm754, %v831, -inf
        %833 = vmax.xlane.f32.xlu0 %v832
        %v834 = vpop.xlane.xlu0 %833
        %v835 = vsub.f32 %v831, %v834
        %v836 = vmul.f32 %v835, 1.442695
        %v837 = vpow.pop %v836
        %v838 = vld [vmem:[%s495] sm:$0x1]
        %v839 = vlaneseq
        %v840 = vshrl.u32 %v839, 7
        %v841 = vlaneseq
        %v842 = vand.u32 %v841, 127
        %vm843 = vcmp.eq.s32.totalorder %v840, %v842
        %v844 = vsel %vm843, 1, 0
        %v845 = vcvt.s32.f32 %v844
        %v846 = vsub.f32 1.0, %v838
        %v848 = vlaneseq
        %v849 = vshrl.u32 %v848, 7
        %v850 = vsub.s32 0, %v849
        %v851 = vrot.slane %v846, %v850
        %v853 = vmul.f32 %v851, %v845
        %v855 = vlaneseq
        %v856 = vshrl.u32 %v855, 7
        %v857 = vsub.s32 0, %v856
        %v858 = vrot.slane %v838, %v857
        %v860 = vadd.f32 %v858, %v853
        %v861 = vmul.f32 %v837, %v860
        %v862 = vadd.f32 %v861, 1.25e-07
        %v863 = vsel %vm754, %v861, 0.0
        %864 = vadd.xlane.f32.xlu0 %v863
        %v865 = vpop.xlane.xlu0 %864
        %v866 = vadd.f32 %v865, 1e-06
        %v867 = vrcp.pop %v866
        %v868 = vmul.f32 %v862, %v867
        %v870 = vsel %vm754, %v868, 0
        %872 = vmatprep.subr.mxu0 0.0
        %873 = vmatpush1.msra.mxu0 0.0
        %874 = vmatprep.subr.mxu0 0.0
        %875 = vmatpush1.msra.mxu0 0.0
        %876 = vmatprep.subr.mxu0 0.0
        %877 = vmatpush1.msra.mxu0 0.0
        %878 = vmatprep.subr.mxu0 0.0
        %879 = vmatpush1.msra.mxu0 0.0
        %880 = vmatprep.subr.mxu0 0.0
        %881 = vmatpush1.msra.mxu0 0.0
        %882 = vmatprep.subr.mxu0 0.0
        %883 = vmatpush1.msra.mxu0 0.0
        %884 = vmatprep.subr.mxu0 0.0
        %885 = vmatpush1.msra.mxu0 0.0
        %886 = vmatprep.subr.mxu0 0.0
        %887 = vmatpush1.msra.mxu0 0.0
        %888 = vmatprep.subr.mxu0 0.0
        %889 = vmatpush1.msra.mxu0 0.0
        %890 = vmatprep.subr.mxu0 0.0
        %891 = vmatpush1.msra.mxu0 0.0
        %892 = vmatprep.subr.mxu0 0.0
        %893 = vmatpush1.msra.mxu0 0.0
        %894 = vmatprep.subr.mxu0 0.0
        %895 = vmatpush1.msra.mxu0 0.0
        %896 = vmatprep.subr.mxu0 0.0
        %897 = vmatpush1.msra.mxu0 0.0
        %898 = vmatprep.subr.mxu0 0.0
        %899 = vmatpush1.msra.mxu0 0.0
        %900 = vmatprep.subr.mxu0 0.0
        %901 = vmatpush1.msra.mxu0 0.0
        %902 = vmatprep.subr.mxu0 0.0
        %903 = vmatpush1.msra.mxu0 %v751
        %904 = vmatprep.subr.mxu0 0.0
        %905 = vmatpush2.msra.mxu0 0.0
        %906 = vmatprep.subr.mxu0 0.0
        %907 = vmatpush2.msra.mxu0 0.0
        %908 = vmatprep.subr.mxu0 0.0
        %909 = vmatpush2.msra.mxu0 0.0
        %910 = vmatprep.subr.mxu0 0.0
        %911 = vmatpush2.msra.mxu0 0.0
        %912 = vmatprep.subr.mxu0 0.0
        %913 = vmatpush2.msra.mxu0 0.0
        %914 = vmatprep.subr.mxu0 0.0
        %915 = vmatpush2.msra.mxu0 0.0
        %916 = vmatprep.subr.mxu0 0.0
        %917 = vmatpush2.msra.mxu0 0.0
        %918 = vmatprep.subr.mxu0 0.0
        %919 = vmatpush2.msra.mxu0 0.0
        %920 = vmatprep.subr.mxu0 0.0
        %921 = vmatpush2.msra.mxu0 0.0
        %922 = vmatprep.subr.mxu0 0.0
        %923 = vmatpush2.msra.mxu0 0.0
        %924 = vmatprep.subr.mxu0 0.0
        %925 = vmatpush2.msra.mxu0 0.0
        %926 = vmatprep.subr.mxu0 0.0
        %927 = vmatpush2.msra.mxu0 0.0
        %928 = vmatprep.subr.mxu0 0.0
        %929 = vmatpush2.msra.mxu0 0.0
        %930 = vmatprep.subr.mxu0 0.0
        %931 = vmatpush2.msra.mxu0 0.0
        %932 = vmatprep.subr.mxu0 0.0
        %933 = vmatpush2.msra.mxu0 0.0
        %934 = vmatprep.subr.mxu0 0.0
        %935 = vmatpush2.msra.mxu0 0.0
        %936 = vmatprep.mubr.f32.mxu0 0.0
        %937 = vmatmul.mubr.f32.gmra.mxu0 %v870
        %v938 = vpop.f32.mrf.mxu0
        %v939 = vadd.f32 0.0, %v938
        %v940 = vpop.f32.mrf.mxu0
        %941 = vdwg.mxu0
        %v942 = vld [vmem:[#allocation2] sm:$0xff]
        %v943 = vld [vmem:[%s499] sm:$0xff]
        %v945 = vsel %vm754, %v939, 0
        %947 = vmatprep.subr.mxu0 0.0
        %948 = vmatpush1.msra.mxu0 0.0
        %949 = vmatprep.subr.mxu0 0.0
        %950 = vmatpush1.msra.mxu0 0.0
        %951 = vmatprep.subr.mxu0 0.0
        %952 = vmatpush1.msra.mxu0 0.0
        %953 = vmatprep.subr.mxu0 0.0
        %954 = vmatpush1.msra.mxu0 0.0
        %955 = vmatprep.subr.mxu0 0.0
        %956 = vmatpush1.msra.mxu0 0.0
        %957 = vmatprep.subr.mxu0 0.0
        %958 = vmatpush1.msra.mxu0 0.0
        %959 = vmatprep.subr.mxu0 0.0
        %960 = vmatpush1.msra.mxu0 0.0
        %961 = vmatprep.subr.mxu0 0.0
        %962 = vmatpush1.msra.mxu0 0.0
        %963 = vmatprep.subr.mxu0 0.0
        %964 = vmatpush1.msra.mxu0 0.0
        %965 = vmatprep.subr.mxu0 0.0
        %966 = vmatpush1.msra.mxu0 0.0
        %967 = vmatprep.subr.mxu0 0.0
        %968 = vmatpush1.msra.mxu0 0.0
        %969 = vmatprep.subr.mxu0 0.0
        %970 = vmatpush1.msra.mxu0 0.0
        %971 = vmatprep.subr.mxu0 0.0
        %972 = vmatpush1.msra.mxu0 0.0
        %973 = vmatprep.subr.mxu0 0.0
        %974 = vmatpush1.msra.mxu0 0.0
        %975 = vmatprep.subr.mxu0 0.0
        %976 = vmatpush1.msra.mxu0 0.0
        %977 = vmatprep.subr.mxu0 0.0
        %978 = vmatpush1.msra.mxu0 %v943
        %979 = vmatprep.subr.mxu0 0.0
        %980 = vmatpush2.msra.mxu0 0.0
        %981 = vmatprep.subr.mxu0 0.0
        %982 = vmatpush2.msra.mxu0 0.0
        %983 = vmatprep.subr.mxu0 0.0
        %984 = vmatpush2.msra.mxu0 0.0
        %985 = vmatprep.subr.mxu0 0.0
        %986 = vmatpush2.msra.mxu0 0.0
        %987 = vmatprep.subr.mxu0 0.0
        %988 = vmatpush2.msra.mxu0 0.0
        %989 = vmatprep.subr.mxu0 0.0
        %990 = vmatpush2.msra.mxu0 0.0
        %991 = vmatprep.subr.mxu0 0.0
        %992 = vmatpush2.msra.mxu0 0.0
        %993 = vmatprep.subr.mxu0 0.0
        %994 = vmatpush2.msra.mxu0 0.0
        %995 = vmatprep.subr.mxu0 0.0
        %996 = vmatpush2.msra.mxu0 0.0
        %997 = vmatprep.subr.mxu0 0.0
        %998 = vmatpush2.msra.mxu0 0.0
        %999 = vmatprep.subr.mxu0 0.0
        %1000 = vmatpush2.msra.mxu0 0.0
        %1001 = vmatprep.subr.mxu0 0.0
        %1002 = vmatpush2.msra.mxu0 0.0
        %1003 = vmatprep.subr.mxu0 0.0
        %1004 = vmatpush2.msra.mxu0 0.0
        %1005 = vmatprep.subr.mxu0 0.0
        %1006 = vmatpush2.msra.mxu0 0.0
        %1007 = vmatprep.subr.mxu0 0.0
        %1008 = vmatpush2.msra.mxu0 0.0
        %1009 = vmatprep.subr.mxu0 0.0
        %1010 = vmatpush2.msra.mxu0 0.0
        %1011 = vmatprep.mubr.f32.mxu0 0.0
        %1012 = vmatmul.mubr.f32.gmra.mxu0 %v945
        %v1013 = vpop.f32.mrf.mxu0
        %v1014 = vadd.f32 0.0, %v1013
        %v1015 = vpop.f32.mrf.mxu0
        %1016 = vdwg.mxu0
        %v1017 = vadd.f32 %v942, %v1014
        %1018 = vst.msk [vmem:[#allocation2] sm:$0xff] %vm518, %v1017
        %p1019 = scmp.eq.s32.totalorder %s29, 3
        // Predicated region
        $region65: #{tpu_custom_call.1} parent=59 // pred_check
          %p1020 = pneg %p1019
        $region66: #{tpu_custom_call.1} parent=59 // pred_check_branch
          %1022 = sbr.rel (%p1020) target = $region68
        $region67: #{tpu_custom_call.1} parent=59 // pred_region
          %v1023 = vld [vmem:[#allocation2] sm:$0xff]
          %v1024 = vld [vmem:[%s9] sm:$0x1]
          %v1026 = vlaneseq
          %v1027 = vshrl.u32 %v1026, 7
          %v1028 = vsub.s32 0, %v1027
          %v1029 = vrot.slane %v1024, %v1028
          %v1031 = vadd.f32 %v1023, %v1029
          %1032 = vst.msk [vmem:[%s464] sm:$0xff] %vm518, %v1031
        $region68: #{tpu_custom_call.1} parent=59 // pred_fallthru
          _
        %s1033 = sand.u32 %s299, 1
        %s1034 = scalar_lea.sflag [#allocation4], %s1033
        %s1035 = sand.u32 %s299, 1
        %s1036 = smul.addr %s1035, 8
        %s1037 = scalar_lea.vmem [#allocation3], %s1036
        // Predicated region
        $region69: #{tpu_custom_call.1} parent=59 // pred_check
          %p1038 = pneg %p309
        $region70: #{tpu_custom_call.1} parent=59 // pred_check_branch
          %1040 = sbr.rel (%p1038) target = $region72
        $region71: #{tpu_custom_call.1} parent=59 // pred_region
          %s1042 = ssub.s32 128, 128
          %1043 = vsyncadd %s1034, %s1042
          %s1044 = smul.addr %s28, 128
          %s1045 = scalar_lea.hbm %s10, %s1044
          %s1047 = sshll.u32 %s1037, 4
          %s1048 = int_to_ptr.vmem [resolvable:$true] %s1047
          %1050 = dma.vmem_to_hbm [thread:$0]  %s1048, 128, %s1045, %s1034
        $region72: #{tpu_custom_call.1} parent=59 // pred_fallthru
          _
      $region60: #{tpu_custom_call.1} parent=5 // pred_fallthru
        _
      %p1051 = scmp.le.s32.totalorder 2, %s19
      // Predicated region
      $region73: #{tpu_custom_call.1} parent=5 // pred_check
        %p1052 = pneg %p1051
      $region74: #{tpu_custom_call.1} parent=5 // pred_check_branch
        %1054 = sbr.rel (%p1052) target = $region76
      $region75: #{tpu_custom_call.1} parent=5 // pred_region
        %s1055 = ssub.s32 %s19, 2
        // Predicated region
        $region77: #{tpu_custom_call.1} parent=75 // pred_check
          %p1056 = pneg %p315
        $region78: #{tpu_custom_call.1} parent=75 // pred_check_branch
          %1058 = sbr.rel (%p1056) target = $region80
        $region79: #{tpu_custom_call.1} parent=75 // pred_region
          %s1059 = sand.u32 %s300, 1
          %s1060 = scalar_lea.sflag [#allocation4], %s1059
          %s1061 = sand.u32 %s300, 1
          %s1062 = smul.addr %s1061, 8
          %s1063 = scalar_lea.vmem [#allocation3], %s1062
          %1064 = dma.done %s1060, 128
        $region80: #{tpu_custom_call.1} parent=75 // pred_fallthru
          _
      $region76: #{tpu_custom_call.1} parent=5 // pred_fallthru
        _
    $region6: #{tpu_custom_call.1} parent=1 // loop_footer
      %s23 = sadd.s32 1, %s19
    $region7: #{tpu_custom_call.1} parent=1 // loop_footer_branch
      %18 = sbr.rel target = $region3
    $region8: #{tpu_custom_call.1} parent=1 // loop_exit
      _
    %1065 = vsyncpa [#allocation4], 1
    %s1066 = scalar_lea.sflag [#allocation4], 1
    %1067 = vsyncpa %s1066, 1

</llo_original>
